<compile_context>
chip_gen: v5e
topology: v5e:2x2
jax: 0.10.0
libtpu: 0.0.40
codegen_flags: <defaults>
</compile_context>

<pallas_src>
import functools

import jax
import jax.numpy as jnp
from jax import lax
from jax.experimental import pallas as pl
from jax.experimental.pallas import tpu as pltpu

EPS = 1e-5
_VMEM_LIMIT_BYTES = 48 * 1024 * 1024   # < 64 MiB physical on v7x, far under v5e/v6e


# ---------------------------------------------------------------------------
# Phase 1: 1x1 conv (channel matmul) + per-batch BN partial statistics.
#   w_ref   : (Cout, Cin)       resident across the grid
#   x_ref   : (Cin,  T)         current HW-tile of x[b]   (lane-dense)
#   z_ref   : (Cout, T)         conv output tile          (lane-dense)
#   sum_ref : (Cout, 1)         per-batch running sum   (resident over HW axis)
#   sq_ref  : (Cout, 1)         per-batch running sum of squares
# ---------------------------------------------------------------------------
def conv1x1_stats_kernel(w_ref, x_ref, z_ref, sum_ref, sq_ref):
    @pl.when(pl.program_id(1) == 0)
    def _():
        sum_ref[...] = jnp.zeros_like(sum_ref)
        sq_ref[...] = jnp.zeros_like(sq_ref)

    z = jnp.dot(w_ref[...], x_ref[...], preferred_element_type=jnp.float32)
    z_ref[...] = z
    sum_ref[...] += jnp.sum(z, axis=1, keepdims=True)
    sq_ref[...] += jnp.sum(z * z, axis=1, keepdims=True)


# ---------------------------------------------------------------------------
# Phase 2: per-channel affine  Y = Z * scale + shift, with the final permute
# fused in (transpose lands on the XLU slot; the narrow Cout-lane store is
# unavoidable given the module's (B, H*W, Cout) output layout).
# ---------------------------------------------------------------------------
def bn_affine_kernel(z_ref, scale_ref, shift_ref, y_ref, *, transpose_out):
    y = z_ref[...] * scale_ref[...] + shift_ref[...]          # (Cout, T)
    if transpose_out:
        y_ref[...] = jnp.transpose(y, (1, 0)).astype(y_ref.dtype)   # (T, Cout)
    else:
        y_ref[...] = y.astype(y_ref.dtype)


def _pick_tile_hw(hw, cin, cout, vmem_budget_bytes, max_tile=32768):
    """Largest multiple of 128 dividing hw, capped by a VMEM working-set budget."""
    per_col = 2 * 4 * (cin + 2 * cout)            # double-buffered f32 in + out bytes/column
    cap = max(128, min(max_tile, vmem_budget_bytes // per_col))
    if hw <= cap:
        return hw                                  # full extent (always a legal block)
    if hw % 128 != 0:
        return hw                                  # lane rule forces full-extent block
    best = 128
    t = 128
    while t <= cap:
        if hw % t == 0:
            best = t
        t += 128
    return best


def imageqnet_forward(x_nchw, params, *, compute_dtype=jnp.float32,
                      vmem_budget_bytes=24 << 20):
    """x_nchw: (B, C, H, W).  Returns (B, H*W, C//4), matching ImageQNet.forward."""
    B, Cin, H, W = x_nchw.shape
    w = params["w"]                                # (Cout, Cin) == torch weight[:, :, 0, 0]
    Cout = w.shape[0]
    HW = H * W
    M = B * HW

    tile = _pick_tile_hw(HW, Cin, Cout, vmem_budget_bytes)
    T = HW // tile
    # In-kernel transpose / lane-dense blocks need a 128-multiple tile and >=8 sublanes.
    fuse_permute = (tile % 128 == 0) and (Cout % 8 == 0)

    # Free reshape (contiguous) — no XLA transpose pass.
    x3 = x_nchw.reshape(B, Cin, HW).astype(compute_dtype)
    w_in = w.astype(compute_dtype)

    # ---- phase 1: conv + per-batch partial stats ------------------------------
    z, s1, s2 = pl.pallas_call(
        conv1x1_stats_kernel,
        grid=(B, T),
        in_specs=[
            pl.BlockSpec((Cout, Cin), lambda b, i: (0, 0)),
            pl.BlockSpec((pl.Squeezed(), Cin, tile), lambda b, i: (b, 0, i)),
        ],
        out_specs=(
            pl.BlockSpec((pl.Squeezed(), Cout, tile), lambda b, i: (b, 0, i)),
            pl.BlockSpec((pl.Squeezed(), Cout, 1), lambda b, i: (b, 0, 0)),
            pl.BlockSpec((pl.Squeezed(), Cout, 1), lambda b, i: (b, 0, 0)),
        ),
        out_shape=(
            jax.ShapeDtypeStruct((B, Cout, HW), jnp.float32),
            jax.ShapeDtypeStruct((B, Cout, 1), jnp.float32),
            jax.ShapeDtypeStruct((B, Cout, 1), jnp.float32),
        ),
        compiler_params=pltpu.CompilerParams(
            dimension_semantics=("parallel", "arbitrary"),
            vmem_limit_bytes=_VMEM_LIMIT_BYTES),
    )(w_in, x3)

    # ---- fold partials into per-channel scale / shift (tiny scalar work) ------
    total_sum = jnp.sum(s1[:, :, 0], axis=0)                 # (Cout,)
    total_sq = jnp.sum(s2[:, :, 0], axis=0)                  # (Cout,)
    mean = total_sum / M
    var = jnp.maximum(total_sq / M - mean * mean, 0.0)       # biased (training) var
    scale = params["gamma"].astype(jnp.float32) * lax.rsqrt(var + EPS)
    shift = params["beta"].astype(jnp.float32) - mean * scale   # conv bias cancels here
    scale = scale.reshape(Cout, 1)
    shift = shift.reshape(Cout, 1)

    # ---- phase 2: affine (+ fused output permute) ------------------------------
    out_dtype = x_nchw.dtype
    if fuse_permute:
        out_shape = jax.ShapeDtypeStruct((B, HW, Cout), out_dtype)
        out_spec = pl.BlockSpec((pl.Squeezed(), tile, Cout), lambda b, i: (b, i, 0))
    else:
        out_shape = jax.ShapeDtypeStruct((B, Cout, HW), out_dtype)
        out_spec = pl.BlockSpec((pl.Squeezed(), Cout, tile), lambda b, i: (b, 0, i))

    y = pl.pallas_call(
        functools.partial(bn_affine_kernel, transpose_out=fuse_permute),
        grid=(B, T),
        in_specs=[
            pl.BlockSpec((pl.Squeezed(), Cout, tile), lambda b, i: (b, 0, i)),
            pl.BlockSpec((Cout, 1), lambda b, i: (0, 0)),
            pl.BlockSpec((Cout, 1), lambda b, i: (0, 0)),
        ],
        out_specs=out_spec,
        out_shape=out_shape,
        compiler_params=pltpu.CompilerParams(
            dimension_semantics=("parallel", "parallel"),
            vmem_limit_bytes=_VMEM_LIMIT_BYTES),
    )(z, scale, shift)

    if not fuse_permute:
        # Fallback path for ragged H*W / tiny Cout: permute in XLA.
        y = jnp.transpose(y, (0, 2, 1))
    return y


def imageqnet_reference(x_nchw, params):
    """Plain-JAX reference with full PyTorch semantics (incl. the conv bias)."""
    x = x_nchw.astype(jnp.float32)
    B, Cin, H, W = x.shape
    w = params["w"]
    Cout = w.shape[0]
    z = jnp.einsum("oc,bchw->bohw", w, x) + params["b"].reshape(1, Cout, 1, 1)
    mean = jnp.mean(z, axis=(0, 2, 3), keepdims=True)
    var = jnp.mean((z - mean) ** 2, axis=(0, 2, 3), keepdims=True)
    zn = ((z - mean) * lax.rsqrt(var + EPS)
          * params["gamma"].reshape(1, Cout, 1, 1)
          + params["beta"].reshape(1, Cout, 1, 1))
    return jnp.transpose(zn.reshape(B, Cout, H * W), (0, 2, 1))


def init_params(key, cin):
    cout = cin // 4
    ks = jax.random.split(key, 4)
    return {
        "w": 0.1 * jax.random.normal(ks[0], (cout, cin), jnp.float32),
        "b": 0.05 * jax.random.normal(ks[1], (cout,), jnp.float32),
        "gamma": 1.0 + 0.1 * jax.random.normal(ks[2], (cout,), jnp.float32),
        "beta": 0.05 * jax.random.normal(ks[3], (cout,), jnp.float32),
    }


if __name__ == "__main__":
    key = jax.random.PRNGKey(0)
    kx, kp = jax.random.split(key)

    B, C, H, W = 2, 32, 16, 16           # input_dim=32 -> Cout=8, HW=256
    x = jax.random.normal(kx, (B, C, H, W), jnp.float32)
    params = init_params(kp, C)

    fwd = jax.jit(imageqnet_forward)
    out = jax.block_until_ready(fwd(x, params))

    ref = imageqnet_reference(x, params)
    assert out.shape == (B, H * W, C // 4), out.shape
    assert jnp.allclose(out, ref, atol=1e-4, rtol=1e-4), \
        f"max abs err {jnp.max(jnp.abs(out - ref))}"

    print("KERNEL_OK")
</pallas_src>

<mosaic_0001>
module attributes {stable_mosaic.version = 11 : i64} {
  func.func @conv1x1_stats_kernel(%arg0: i32, %arg1: i32, %arg2: memref<8x32xf32, #tpu.memory_space<vmem>>, %arg3: memref<1x32x256xf32, #tpu.memory_space<vmem>>, %arg4: memref<1x8x256xf32, #tpu.memory_space<vmem>>, %arg5: memref<1x8x1xf32, #tpu.memory_space<vmem>>, %arg6: memref<1x8x1xf32, #tpu.memory_space<vmem>>) attributes {dimension_semantics = [#tpu.dimension_semantics<parallel>, #tpu.dimension_semantics<arbitrary>], iteration_bounds = array<i64: 2, 1>, scalar_prefetch = 0 : i64, scratch_operands = 0 : i64, tpu.core_type = #tpu.core_type<tc>, window_params = [{pipeline_mode = #tpu.pipeline_mode<synchronous>, transform_indices = @transform_0, window_bounds = array<i64: 8, 32>}, {transform_indices = @transform_1, window_bounds = array<i64: 1, 32, 256>}, {transform_indices = @transform_2, window_bounds = array<i64: 1, 8, 256>}, {transform_indices = @transform_3, window_bounds = array<i64: 1, 8, 1>}, {transform_indices = @transform_4, window_bounds = array<i64: 1, 8, 1>}]} {
    %c0_i32 = arith.constant 0 : i32
    %0 = arith.cmpi eq, %arg1, %c0_i32 : i32
    %1 = arith.extui %0 : i1 to i32
    %c0_i32_0 = arith.constant 0 : i32
    %2 = arith.cmpi ne, %1, %c0_i32_0 : i32
    scf.if %2 {
      %cst_22 = arith.constant 0.000000e+00 : f32
      %27 = vector.broadcast %cst_22 : f32 to vector<8x1xf32>
      %c0_23 = arith.constant 0 : index
      %c0_24 = arith.constant 0 : index
      %c0_25 = arith.constant 0 : index
      %28 = vector.load %arg5[%c0_23, %c0_24, %c0_25] : memref<1x8x1xf32, #tpu.memory_space<vmem>>, vector<1x8x1xf32>
      %29 = vector.shape_cast %28 : vector<1x8x1xf32> to vector<8x1xf32>
      %30 = vector.shape_cast %27 : vector<8x1xf32> to vector<1x8x1xf32>
      tpu.vector_store %arg5[%c0_23, %c0_24, %c0_25], %30 {strides = array<i32>} : memref<1x8x1xf32, #tpu.memory_space<vmem>>, vector<1x8x1xf32>,
      %cst_26 = arith.constant 0.000000e+00 : f32
      %31 = vector.broadcast %cst_26 : f32 to vector<8x1xf32>
      %c0_27 = arith.constant 0 : index
      %c0_28 = arith.constant 0 : index
      %c0_29 = arith.constant 0 : index
      %32 = vector.load %arg6[%c0_27, %c0_28, %c0_29] : memref<1x8x1xf32, #tpu.memory_space<vmem>>, vector<1x8x1xf32>
      %33 = vector.shape_cast %32 : vector<1x8x1xf32> to vector<8x1xf32>
      %34 = vector.shape_cast %31 : vector<8x1xf32> to vector<1x8x1xf32>
      tpu.vector_store %arg6[%c0_27, %c0_28, %c0_29], %34 {strides = array<i32>} : memref<1x8x1xf32, #tpu.memory_space<vmem>>, vector<1x8x1xf32>,
    } else {
    }
    %c0 = arith.constant 0 : index
    %c0_1 = arith.constant 0 : index
    %3 = vector.load %arg2[%c0, %c0_1] : memref<8x32xf32, #tpu.memory_space<vmem>>, vector<8x32xf32>
    %c0_2 = arith.constant 0 : index
    %c0_3 = arith.constant 0 : index
    %c0_4 = arith.constant 0 : index
    %4 = vector.load %arg3[%c0_2, %c0_3, %c0_4] : memref<1x32x256xf32, #tpu.memory_space<vmem>>, vector<1x32x256xf32>
    %5 = vector.shape_cast %4 : vector<1x32x256xf32> to vector<32x256xf32>
    %cst = arith.constant dense<0.000000e+00> : vector<8x256xf32>
    %6 = tpu.matmul %3, %5, %cst {dimension_numbers = #tpu.dot_dimension_numbers<[1], [0], [0], [1], [0, 0, 1, 1], [], []>} : vector<8x32xf32>, vector<32x256xf32>, vector<8x256xf32> -> vector<8x256xf32>
    %c0_5 = arith.constant 0 : index
    %c0_6 = arith.constant 0 : index
    %c0_7 = arith.constant 0 : index
    %7 = vector.load %arg4[%c0_5, %c0_6, %c0_7] : memref<1x8x256xf32, #tpu.memory_space<vmem>>, vector<1x8x256xf32>
    %8 = vector.shape_cast %7 : vector<1x8x256xf32> to vector<8x256xf32>
    %9 = vector.shape_cast %6 : vector<8x256xf32> to vector<1x8x256xf32>
    tpu.vector_store %arg4[%c0_5, %c0_6, %c0_7], %9 {strides = array<i32>} : memref<1x8x256xf32, #tpu.memory_space<vmem>>, vector<1x8x256xf32>,
    %c0_8 = arith.constant 0 : index
    %c0_9 = arith.constant 0 : index
    %c0_10 = arith.constant 0 : index
    %10 = vector.load %arg5[%c0_8, %c0_9, %c0_10] : memref<1x8x1xf32, #tpu.memory_space<vmem>>, vector<1x8x1xf32>
    %11 = vector.shape_cast %10 : vector<1x8x1xf32> to vector<8x1xf32>
    %cst_11 = arith.constant dense<0.000000e+00> : vector<8xf32>
    %12 = vector.multi_reduction <add>, %6, %cst_11 [1] : vector<8x256xf32> to vector<8xf32>
    %13 = vector.shape_cast %12 : vector<8xf32> to vector<8x1xf32>
    %14 = arith.addf %11, %13 : vector<8x1xf32>
    %c0_12 = arith.constant 0 : index
    %c0_13 = arith.constant 0 : index
    %c0_14 = arith.constant 0 : index
    %15 = vector.load %arg5[%c0_12, %c0_13, %c0_14] : memref<1x8x1xf32, #tpu.memory_space<vmem>>, vector<1x8x1xf32>
    %16 = vector.shape_cast %15 : vector<1x8x1xf32> to vector<8x1xf32>
    %17 = vector.shape_cast %14 : vector<8x1xf32> to vector<1x8x1xf32>
    tpu.vector_store %arg5[%c0_12, %c0_13, %c0_14], %17 {strides = array<i32>} : memref<1x8x1xf32, #tpu.memory_space<vmem>>, vector<1x8x1xf32>,
    %c0_15 = arith.constant 0 : index
    %c0_16 = arith.constant 0 : index
    %c0_17 = arith.constant 0 : index
    %18 = vector.load %arg6[%c0_15, %c0_16, %c0_17] : memref<1x8x1xf32, #tpu.memory_space<vmem>>, vector<1x8x1xf32>
    %19 = vector.shape_cast %18 : vector<1x8x1xf32> to vector<8x1xf32>
    %20 = arith.mulf %6, %6 : vector<8x256xf32>
    %cst_18 = arith.constant dense<0.000000e+00> : vector<8xf32>
    %21 = vector.multi_reduction <add>, %20, %cst_18 [1] : vector<8x256xf32> to vector<8xf32>
    %22 = vector.shape_cast %21 : vector<8xf32> to vector<8x1xf32>
    %23 = arith.addf %19, %22 : vector<8x1xf32>
    %c0_19 = arith.constant 0 : index
    %c0_20 = arith.constant 0 : index
    %c0_21 = arith.constant 0 : index
    %24 = vector.load %arg6[%c0_19, %c0_20, %c0_21] : memref<1x8x1xf32, #tpu.memory_space<vmem>>, vector<1x8x1xf32>
    %25 = vector.shape_cast %24 : vector<1x8x1xf32> to vector<8x1xf32>
    %26 = vector.shape_cast %23 : vector<8x1xf32> to vector<1x8x1xf32>
    tpu.vector_store %arg6[%c0_19, %c0_20, %c0_21], %26 {strides = array<i32>} : memref<1x8x1xf32, #tpu.memory_space<vmem>>, vector<1x8x1xf32>,
    return
  }
  func.func @transform_0(%arg0: i32, %arg1: i32) -> (i32, i32) {
    %c0_i32 = arith.constant 0 : i32
    %c0_i32_0 = arith.constant 0 : i32
    %c0_i32_1 = arith.constant 0 : i32
    return %c0_i32, %c0_i32_0 : i32, i32
  }
  func.func @transform_1(%arg0: i32, %arg1: i32) -> (i32, i32, i32) {
    %c0_i32 = arith.constant 0 : i32
    %c0_i32_0 = arith.constant 0 : i32
    return %arg0, %c0_i32, %arg1 : i32, i32, i32
  }
  func.func @transform_2(%arg0: i32, %arg1: i32) -> (i32, i32, i32) {
    %c0_i32 = arith.constant 0 : i32
    %c0_i32_0 = arith.constant 0 : i32
    return %arg0, %c0_i32, %arg1 : i32, i32, i32
  }
  func.func @transform_3(%arg0: i32, %arg1: i32) -> (i32, i32, i32) {
    %c0_i32 = arith.constant 0 : i32
    %c0_i32_0 = arith.constant 0 : i32
    %c0_i32_1 = arith.constant 0 : i32
    return %arg0, %c0_i32, %c0_i32_0 : i32, i32, i32
  }
  func.func @transform_4(%arg0: i32, %arg1: i32) -> (i32, i32, i32) {
    %c0_i32 = arith.constant 0 : i32
    %c0_i32_0 = arith.constant 0 : i32
    %c0_i32_1 = arith.constant 0 : i32
    return %arg0, %c0_i32, %c0_i32_0 : i32, i32, i32
  }
}

module attributes {stable_mosaic.version = 11 : i64} {
  func.func @bn_affine_kernel(%arg0: i32, %arg1: i32, %arg2: memref<1x8x256xf32, #tpu.memory_space<vmem>>, %arg3: memref<8x1xf32, #tpu.memory_space<vmem>>, %arg4: memref<8x1xf32, #tpu.memory_space<vmem>>, %arg5: memref<1x256x8xf32, #tpu.memory_space<vmem>>) attributes {dimension_semantics = [#tpu.dimension_semantics<parallel>, #tpu.dimension_semantics<parallel>], iteration_bounds = array<i64: 2, 1>, scalar_prefetch = 0 : i64, scratch_operands = 0 : i64, tpu.core_type = #tpu.core_type<tc>, window_params = [{transform_indices = @transform_0, window_bounds = array<i64: 1, 8, 256>}, {pipeline_mode = #tpu.pipeline_mode<synchronous>, transform_indices = @transform_1, window_bounds = array<i64: 8, 1>}, {pipeline_mode = #tpu.pipeline_mode<synchronous>, transform_indices = @transform_2, window_bounds = array<i64: 8, 1>}, {transform_indices = @transform_3, window_bounds = array<i64: 1, 256, 8>}]} {
    %c0 = arith.constant 0 : index
    %c0_0 = arith.constant 0 : index
    %c0_1 = arith.constant 0 : index
    %0 = vector.load %arg2[%c0, %c0_0, %c0_1] : memref<1x8x256xf32, #tpu.memory_space<vmem>>, vector<1x8x256xf32>
    %1 = vector.shape_cast %0 : vector<1x8x256xf32> to vector<8x256xf32>
    %c0_2 = arith.constant 0 : index
    %c0_3 = arith.constant 0 : index
    %2 = vector.load %arg3[%c0_2, %c0_3] : memref<8x1xf32, #tpu.memory_space<vmem>>, vector<8x1xf32>
    %3 = vector.broadcast %2 : vector<8x1xf32> to vector<8x256xf32>
    %4 = arith.mulf %1, %3 : vector<8x256xf32>
    %c0_4 = arith.constant 0 : index
    %c0_5 = arith.constant 0 : index
    %5 = vector.load %arg4[%c0_4, %c0_5] : memref<8x1xf32, #tpu.memory_space<vmem>>, vector<8x1xf32>
    %6 = vector.broadcast %5 : vector<8x1xf32> to vector<8x256xf32>
    %7 = arith.addf %4, %6 : vector<8x256xf32>
    %8 = tpu.transpose %7, [1, 0] : vector<8x256xf32> -> vector<256x8xf32>
    %c0_6 = arith.constant 0 : index
    %c0_7 = arith.constant 0 : index
    %c0_8 = arith.constant 0 : index
    %9 = vector.load %arg5[%c0_6, %c0_7, %c0_8] : memref<1x256x8xf32, #tpu.memory_space<vmem>>, vector<1x256x8xf32>
    %10 = vector.shape_cast %9 : vector<1x256x8xf32> to vector<256x8xf32>
    %11 = vector.shape_cast %8 : vector<256x8xf32> to vector<1x256x8xf32>
    tpu.vector_store %arg5[%c0_6, %c0_7, %c0_8], %11 {strides = array<i32>} : memref<1x256x8xf32, #tpu.memory_space<vmem>>, vector<1x256x8xf32>,
    return
  }
  func.func @transform_0(%arg0: i32, %arg1: i32) -> (i32, i32, i32) {
    %c0_i32 = arith.constant 0 : i32
    %c0_i32_0 = arith.constant 0 : i32
    return %arg0, %c0_i32, %arg1 : i32, i32, i32
  }
  func.func @transform_1(%arg0: i32, %arg1: i32) -> (i32, i32) {
    %c0_i32 = arith.constant 0 : i32
    %c0_i32_0 = arith.constant 0 : i32
    %c0_i32_1 = arith.constant 0 : i32
    return %c0_i32, %c0_i32_0 : i32, i32
  }
  func.func @transform_2(%arg0: i32, %arg1: i32) -> (i32, i32) {
    %c0_i32 = arith.constant 0 : i32
    %c0_i32_0 = arith.constant 0 : i32
    %c0_i32_1 = arith.constant 0 : i32
    return %c0_i32, %c0_i32_0 : i32, i32
  }
  func.func @transform_3(%arg0: i32, %arg1: i32) -> (i32, i32, i32) {
    %c0_i32 = arith.constant 0 : i32
    %c0_i32_0 = arith.constant 0 : i32
    return %arg0, %arg1, %c0_i32 : i32, i32, i32
  }
}

</mosaic_0001>

<llo_original>
// kernel: imageqnet_forward.2
$region0: #{imageqnet_forward.2}
  #allocation0 [shape = 'u32[]', space=smem, size = 0x4, offset = 0x4, fixed_abs, tag = 'smem constant byte address 0x4 - core index']
  #allocation1 [shape = 'u32[72,128]{1,0:T(1,128)}', space=vmem, size = 0x9000, scoped, tag = 'internal scratch']
  %s0 = inlined_call_operand.vmem [shape: f32[8,32], index: 0, kind: input, shape index: {}]
  %s1 = inlined_call_operand.vmem [shape: f32[2,32,256], index: 1, kind: input, shape index: {}]
  %s2 = inlined_call_operand.vmem [shape: f32[2,8,256], index: 2, kind: output, shape index: {0}]
  %s3 = inlined_call_operand.vmem [shape: f32[2,8,1], index: 3, kind: output, shape index: {1}]
  %s4 = inlined_call_operand.vmem [shape: f32[2,8,1], index: 4, kind: output, shape index: {2}]
  %5 = xla_tuple %s2, %s3, %s4
  %s6 = sld [smem:[#allocation0]]
  $region61: #{imageqnet_forward.2} parent=0
    _
  %s8 = ssub.s32 1, %s6
  %s9 = scalar_select 0, %s8, %s6
  loop: start=0, step=1, limit=4
  $region2: #{imageqnet_forward.2} parent=0 // loop_pre_header
    _
  $region3: #{imageqnet_forward.2} parent=0 // loop_header
    %s11 = sphi 0, %s15
    %p12 = scmp.ge.s32.totalorder %s11, 4
    %s18 = sphi 0, %s30
    %s19 = sphi 0, %s26
    %s20 = sphi 0, %s18
    %s21 = sphi 0, %s19
    %s22 = sphi 0, %s20
    %s23 = sphi 0, %s21
    %s31 = sphi 0, %s31
    %s33 = sphi 0, %s31
    %s34 = sphi 0, %s33
    %s48 = sphi 0, %s34
    %s56 = sphi 0, %s58
    %s59 = sphi 0, %s56
    %s60 = sphi 0, %s59
    %s76 = sphi 0, %s60
    %s84 = sphi 0, %s86
    %s87 = sphi 0, %s84
    %s88 = sphi 0, %s87
    %s104 = sphi 0, %s88
    %s110 = sphi 0, %s112
    %s113 = sphi 0, %s110
    %s114 = sphi 0, %s113
    %s130 = sphi 0, %s114
    %s136 = sphi 0, %s138
    %s139 = sphi 0, %s136
    %s140 = sphi 0, %s139
    %s156 = sphi 0, %s140
  $region4: #{imageqnet_forward.2} parent=0 // loop_header_branch
    %14 = sbr.rel (%p12) target = $region8
  $region5: #{imageqnet_forward.2} parent=0 // loop_body
    %s16 = ssub.s32 %s11, 1
    %s17 = ssub.s32 %s11, 2
    %s24 = sadd.s32 1, %s19
    %p25 = scmp.ge.s32.totalorder %s24, 1
    %s26 = scalar_select %p25, 0, %s24
    %s27 = sadd.s32 1, %s18
    %s28 = scalar_select %p25, %s27, %s18
    %p29 = scmp.ge.s32.totalorder %s28, 2
    %s30 = scalar_select %p29, 0, %s28
    %s32 = sadd.s32 %s31, 1
    %p35 = scmp.eq.s32.totalorder %s11, 1
    %p36 = scmp.ne.s32.totalorder %s31, %s33
    %p37 = scmp.eq.s32.totalorder %s11, 0
    %p38 = por %p36, %p37
    %p39 = scmp.ne.s32.totalorder %s31, %s33
    %p40 = scmp.eq.s32.totalorder %s16, 1
    %p41 = por %p39, %p40
    %p42 = scmp.ne.s32.totalorder %s33, %s34
    %p43 = scmp.eq.s32.totalorder %s16, 0
    %p44 = por %p42, %p43
    %p45 = scmp.ne.s32.totalorder %s33, %s34
    %p46 = scmp.eq.s32.totalorder %s17, 1
    %p47 = por %p45, %p46
    %p49 = scmp.ne.s32.totalorder %s34, %s48
    %p50 = scmp.eq.s32.totalorder %s17, 0
    %p51 = por %p49, %p50
    %s52 = ssub.s32 %s18, %s30
    %s53 = ssub.s32 %s19, %s26
    %s54 = sor.u32 %s52, %s53
    %p55 = scmp.eq.s32.totalorder %s54, 0
    %s57 = sadd.s32 %s56, 1
    %s58 = scalar_select %p55, %s56, %s57
    %p61 = pneg %p55
    %p62 = scmp.eq.s32.totalorder %s11, 1
    %p63 = por %p61, %p62
    %p64 = scmp.ne.s32.totalorder %s56, %s59
    %p65 = scmp.eq.s32.totalorder %s11, 0
    %p66 = por %p64, %p65
    %p67 = scmp.ne.s32.totalorder %s56, %s59
    %p68 = scmp.eq.s32.totalorder %s16, 1
    %p69 = por %p67, %p68
    %p70 = scmp.ne.s32.totalorder %s59, %s60
    %p71 = scmp.eq.s32.totalorder %s16, 0
    %p72 = por %p70, %p71
    %p73 = scmp.ne.s32.totalorder %s59, %s60
    %p74 = scmp.eq.s32.totalorder %s17, 1
    %p75 = por %p73, %p74
    %p77 = scmp.ne.s32.totalorder %s60, %s76
    %p78 = scmp.eq.s32.totalorder %s17, 0
    %p79 = por %p77, %p78
    %s80 = ssub.s32 %s18, %s30
    %s81 = ssub.s32 %s19, %s26
    %s82 = sor.u32 %s80, %s81
    %p83 = scmp.eq.s32.totalorder %s82, 0
    %s85 = sadd.s32 %s84, 1
    %s86 = scalar_select %p83, %s84, %s85
    %p89 = pneg %p83
    %p90 = scmp.eq.s32.totalorder %s11, 1
    %p91 = por %p89, %p90
    %p92 = scmp.ne.s32.totalorder %s84, %s87
    %p93 = scmp.eq.s32.totalorder %s11, 0
    %p94 = por %p92, %p93
    %p95 = scmp.ne.s32.totalorder %s84, %s87
    %p96 = scmp.eq.s32.totalorder %s16, 1
    %p97 = por %p95, %p96
    %p98 = scmp.ne.s32.totalorder %s87, %s88
    %p99 = scmp.eq.s32.totalorder %s16, 0
    %p100 = por %p98, %p99
    %p101 = scmp.ne.s32.totalorder %s87, %s88
    %p102 = scmp.eq.s32.totalorder %s17, 1
    %p103 = por %p101, %p102
    %p105 = scmp.ne.s32.totalorder %s88, %s104
    %p106 = scmp.eq.s32.totalorder %s17, 0
    %p107 = por %p105, %p106
    %s108 = ssub.s32 %s18, %s30
    %p109 = scmp.eq.s32.totalorder %s108, 0
    %s111 = sadd.s32 %s110, 1
    %s112 = scalar_select %p109, %s110, %s111
    %p115 = pneg %p109
    %p116 = scmp.eq.s32.totalorder %s11, 1
    %p117 = por %p115, %p116
    %p118 = scmp.ne.s32.totalorder %s110, %s113
    %p119 = scmp.eq.s32.totalorder %s11, 0
    %p120 = por %p118, %p119
    %p121 = scmp.ne.s32.totalorder %s110, %s113
    %p122 = scmp.eq.s32.totalorder %s16, 1
    %p123 = por %p121, %p122
    %p124 = scmp.ne.s32.totalorder %s113, %s114
    %p125 = scmp.eq.s32.totalorder %s16, 0
    %p126 = por %p124, %p125
    %p127 = scmp.ne.s32.totalorder %s113, %s114
    %p128 = scmp.eq.s32.totalorder %s17, 1
    %p129 = por %p127, %p128
    %p131 = scmp.ne.s32.totalorder %s114, %s130
    %p132 = scmp.eq.s32.totalorder %s17, 0
    %p133 = por %p131, %p132
    %s134 = ssub.s32 %s18, %s30
    %p135 = scmp.eq.s32.totalorder %s134, 0
    %s137 = sadd.s32 %s136, 1
    %s138 = scalar_select %p135, %s136, %s137
    %p141 = pneg %p135
    %p142 = scmp.eq.s32.totalorder %s11, 1
    %p143 = por %p141, %p142
    %p144 = scmp.ne.s32.totalorder %s136, %s139
    %p145 = scmp.eq.s32.totalorder %s11, 0
    %p146 = por %p144, %p145
    %p147 = scmp.ne.s32.totalorder %s136, %s139
    %p148 = scmp.eq.s32.totalorder %s16, 1
    %p149 = por %p147, %p148
    %p150 = scmp.ne.s32.totalorder %s139, %s140
    %p151 = scmp.eq.s32.totalorder %s16, 0
    %p152 = por %p150, %p151
    %p153 = scmp.ne.s32.totalorder %s139, %s140
    %p154 = scmp.eq.s32.totalorder %s17, 1
    %p155 = por %p153, %p154
    %p157 = scmp.ne.s32.totalorder %s140, %s156
    %p158 = scmp.eq.s32.totalorder %s17, 0
    %p159 = por %p157, %p158
    %p160 = scmp.le.s32.totalorder 1, %s11
    %p161 = scmp.lt.s32.totalorder %s11, 3
    %p162 = pnand %p160, %p161
    %p163 = pneg %p162
    // Predicated region
    $region9: #{imageqnet_forward.2} parent=5 // pred_check
      _
    $region10: #{imageqnet_forward.2} parent=5 // pred_check_branch
      %165 = sbr.rel (%p162) target = $region12
    $region11: #{imageqnet_forward.2} parent=5 // pred_region
      %s166 = ssub.s32 %s11, 1
      // Predicated region
      $region13: #{imageqnet_forward.2} parent=11 // pred_check
        %p167 = pneg %p44
      $region14: #{imageqnet_forward.2} parent=11 // pred_check_branch
        %169 = sbr.rel (%p167) target = $region16
      $region15: #{imageqnet_forward.2} parent=11 // pred_region
        _
      $region16: #{imageqnet_forward.2} parent=11 // pred_fallthru
        _
    $region12: #{imageqnet_forward.2} parent=5 // pred_fallthru
      _
    %p170 = scmp.lt.s32.totalorder %s11, 2
    // Predicated region
    $region17: #{imageqnet_forward.2} parent=5 // pred_check
      %p171 = pneg %p170
    $region18: #{imageqnet_forward.2} parent=5 // pred_check_branch
      %173 = sbr.rel (%p171) target = $region20
    $region19: #{imageqnet_forward.2} parent=5 // pred_region
      // Predicated region
      $region21: #{imageqnet_forward.2} parent=19 // pred_check
        %p174 = pneg %p66
      $region22: #{imageqnet_forward.2} parent=19 // pred_check_branch
        %176 = sbr.rel (%p174) target = $region24
      $region23: #{imageqnet_forward.2} parent=19 // pred_region
        %s177 = smul.u32 2, %s19
        %p178 = scmp.lt.s32.totalorder %s18, 1
        %s179 = scalar_select %p178, %s18, 1
        %p180 = scmp.lt.s32.totalorder %s177, 1
        %s181 = scalar_select %p180, %s177, 1
        %s182 = smul.addr %s179, 8
        %s183 = sadd.s32 %s181, %s182
        %s184 = smul.addr %s183, 8
        %s185 = scalar_lea.vmem %s1, %s184
        %s186 = smul.u32 2, %s19
      $region24: #{imageqnet_forward.2} parent=19 // pred_fallthru
        _
    $region20: #{imageqnet_forward.2} parent=5 // pred_fallthru
      _
    %p187 = scmp.le.s32.totalorder 1, %s11
    %p188 = scmp.lt.s32.totalorder %s11, 3
    %p189 = pnand %p187, %p188
    %p190 = pneg %p189
    // Predicated region
    $region25: #{imageqnet_forward.2} parent=5 // pred_check
      _
    $region26: #{imageqnet_forward.2} parent=5 // pred_check_branch
      %192 = sbr.rel (%p189) target = $region28
    $region27: #{imageqnet_forward.2} parent=5 // pred_region
      %s193 = ssub.s32 %s11, 1
      %p194 = pneg %p44
      %p195 = pneg %p41
      %s196 = smul.u32 2, %s21
      %p197 = scmp.lt.s32.totalorder %s20, 1
      %s198 = scalar_select %p197, %s20, 1
      %p199 = scmp.lt.s32.totalorder %s196, 1
      %s200 = scalar_select %p199, %s196, 1
      %s201 = smul.addr %s198, 8
      %s202 = sadd.s32 %s200, %s201
      %s203 = smul.addr %s202, 8
      %s204 = scalar_lea.vmem %s1, %s203
      %p205 = pneg %p72
      %p206 = pneg %p69
      %p207 = pneg %p100
      %p208 = pneg %p97
      %s209 = smul.u32 2, %s21
      %p210 = scmp.lt.s32.totalorder %s20, 1
      %s211 = scalar_select %p210, %s20, 1
      %p212 = scmp.lt.s32.totalorder %s209, 1
      %s213 = scalar_select %p212, %s209, 1
      %s214 = smul.addr %s211, 2
      %s215 = sadd.s32 %s213, %s214
      %s216 = smul.addr %s215, 8
      %s217 = scalar_lea.vmem %s2, %s216
      %p218 = pneg %p126
      %p219 = pneg %p123
      %p220 = scmp.lt.s32.totalorder %s20, 1
      %s221 = scalar_select %p220, %s20, 1
      %s222 = smul.addr %s221, 8
      %s223 = scalar_lea.vmem %s3, %s222
      %p224 = pneg %p152
      %p225 = pneg %p149
      %p226 = scmp.lt.s32.totalorder %s20, 1
      %s227 = scalar_select %p226, %s20, 1
      %s228 = smul.addr %s227, 8
      %s229 = scalar_lea.vmem %s4, %s228
      %s230 = smul.u32 2, %s21
      %p231 = scmp.lt.s32.totalorder %s20, 1
      %s232 = scalar_select %p231, %s20, 1
      %p233 = scmp.lt.s32.totalorder %s230, 1
      %s234 = scalar_select %p233, %s230, 1
      %s235 = smul.addr %s232, 8
      %s236 = sadd.s32 %s234, %s235
      %s237 = smul.addr %s236, 8
      %s238 = scalar_lea.vmem %s1, %s237
      %s239 = smul.u32 2, %s21
      %s240 = smul.u32 2, %s21
      %p241 = scmp.lt.s32.totalorder %s20, 1
      %s242 = scalar_select %p241, %s20, 1
      %p243 = scmp.lt.s32.totalorder %s240, 1
      %s244 = scalar_select %p243, %s240, 1
      %s245 = smul.addr %s242, 2
      %s246 = sadd.s32 %s244, %s245
      %s247 = smul.addr %s246, 8
      %s248 = scalar_lea.vmem %s2, %s247
      %s249 = smul.u32 2, %s21
      %p250 = scmp.lt.s32.totalorder %s20, 1
      %s251 = scalar_select %p250, %s20, 1
      %s252 = smul.addr %s251, 8
      %s253 = scalar_lea.vmem %s3, %s252
      %p254 = scmp.lt.s32.totalorder %s20, 1
      %s255 = scalar_select %p254, %s20, 1
      %s256 = smul.addr %s255, 8
      %s257 = scalar_lea.vmem %s4, %s256
      %p258 = scmp.eq.s32.totalorder %s21, 0
      // Predicated region
      $region29: #{imageqnet_forward.2} parent=27 // pred_check
        %p259 = pneg %p258
      $region30: #{imageqnet_forward.2} parent=27 // pred_check_branch
        %261 = sbr.rel (%p259) target = $region32
      $region31: #{imageqnet_forward.2} parent=27 // pred_region
        %vm262 = vcmask 7168
        %263 = vst.msk [vmem:[%s253] sm:$0xff] %vm262, 0.0
        %264 = vst.msk [vmem:[%s257] sm:$0xff] %vm262, 0.0
      $region32: #{imageqnet_forward.2} parent=27 // pred_fallthru
        _
      %v265 = vld [vmem:[%s0] sm:$0xff]
      %v266 = vld [vmem:[%s238] sm:$0xff]
      %v267 = vld [vmem:[%s238 + $0x8] sm:$0xff]
      %v268 = vld [vmem:[%s238 + $0x10] sm:$0xff]
      %v269 = vld [vmem:[%s238 + $0x18] sm:$0xff]
      %v270 = vld [vmem:[%s238 + $0x20] sm:$0xff]
      %v271 = vld [vmem:[%s238 + $0x28] sm:$0xff]
      %v272 = vld [vmem:[%s238 + $0x30] sm:$0xff]
      %v273 = vld [vmem:[%s238 + $0x38] sm:$0xff]
      %vm274 = vcmask 261120
      %v276 = vsel %vm274, %v265, 0
      %278 = vmatpush.msra.mxu0 0.0
      %279 = vmatpush.msra.mxu0 0.0
      %280 = vmatpush.msra.mxu0 0.0
      %281 = vmatpush.msra.mxu0 0.0
      %282 = vmatpush.msra.mxu0 0.0
      %283 = vmatpush.msra.mxu0 0.0
      %284 = vmatpush.msra.mxu0 0.0
      %285 = vmatpush.msra.mxu0 0.0
      %286 = vmatpush.msra.mxu0 0.0
      %287 = vmatpush.msra.mxu0 0.0
      %288 = vmatpush.msra.mxu0 0.0
      %289 = vmatpush.msra.mxu0 0.0
      %290 = vmatpush.msra.mxu0 %v272
      %291 = vmatpush.msra.mxu0 %v270
      %292 = vmatpush.msra.mxu0 %v268
      %293 = vmatpush.msra.mxu0 %v266
      %294 = vmatmul.f32.gmra.mxu0 %v276
      %v295 = vpop.f32.mrf.mxu0
      %v296 = vadd.f32 0.0, %v295
      %297 = vdwg.mxu0
      %298 = vmatpush.msra.mxu0 0.0
      %299 = vmatpush.msra.mxu0 0.0
      %300 = vmatpush.msra.mxu0 0.0
      %301 = vmatpush.msra.mxu0 0.0
      %302 = vmatpush.msra.mxu0 0.0
      %303 = vmatpush.msra.mxu0 0.0
      %304 = vmatpush.msra.mxu0 0.0
      %305 = vmatpush.msra.mxu0 0.0
      %306 = vmatpush.msra.mxu0 0.0
      %307 = vmatpush.msra.mxu0 0.0
      %308 = vmatpush.msra.mxu0 0.0
      %309 = vmatpush.msra.mxu0 0.0
      %310 = vmatpush.msra.mxu0 %v273
      %311 = vmatpush.msra.mxu0 %v271
      %312 = vmatpush.msra.mxu0 %v269
      %313 = vmatpush.msra.mxu0 %v267
      %314 = vmatmul.f32.gmra.mxu0 %v276
      %v315 = vpop.f32.mrf.mxu0
      %v316 = vadd.f32 0.0, %v315
      %317 = vdwg.mxu0
      %318 = vst [vmem:[%s248] sm:$0xff] %v296
      %319 = vst [vmem:[%s248 + $0x8] sm:$0xff] %v316
      %v320 = vld [vmem:[%s253] sm:$0xff]
      %v321 = vadd.f32 %v296, %v316
      %322 = vadd.xlane.f32.xlu0 %v321
      %v323 = vpop.xlane.xlu0 %322
      %v324 = vadd.f32 %v320, %v323
      %vm325 = vcmask 7168
      %326 = vst.msk [vmem:[%s253] sm:$0xff] %vm325, %v324
      %v327 = vld [vmem:[%s257] sm:$0xff]
      %v328 = vmul.f32 %v296, %v296
      %v329 = vmul.f32 %v316, %v316
      %v330 = vadd.f32 %v328, %v329
      %331 = vadd.xlane.f32.xlu0 %v330
      %v332 = vpop.xlane.xlu0 %331
      %v333 = vadd.f32 %v327, %v332
      %334 = vst.msk [vmem:[%s257] sm:$0xff] %vm325, %v333
      %s335 = smul.u32 2, %s21
      %p336 = scmp.lt.s32.totalorder %s20, 1
      %s337 = scalar_select %p336, %s20, 1
      %p338 = scmp.lt.s32.totalorder %s335, 1
      %s339 = scalar_select %p338, %s335, 1
      %s340 = smul.addr %s337, 2
      %s341 = sadd.s32 %s339, %s340
      %s342 = smul.addr %s341, 8
      %s343 = scalar_lea.vmem %s2, %s342
      %p344 = scmp.lt.s32.totalorder %s20, 1
      %s345 = scalar_select %p344, %s20, 1
      %s346 = smul.addr %s345, 8
      %s347 = scalar_lea.vmem %s3, %s346
      %p348 = scmp.lt.s32.totalorder %s20, 1
      %s349 = scalar_select %p348, %s20, 1
      %s350 = smul.addr %s349, 8
      %s351 = scalar_lea.vmem %s4, %s350
      // Predicated region
      $region33: #{imageqnet_forward.2} parent=27 // pred_check
        %p352 = pneg %p97
      $region34: #{imageqnet_forward.2} parent=27 // pred_check_branch
        %354 = sbr.rel (%p352) target = $region36
      $region35: #{imageqnet_forward.2} parent=27 // pred_region
        %s355 = smul.u32 2, %s21
      $region36: #{imageqnet_forward.2} parent=27 // pred_fallthru
        _
      // Predicated region
      $region37: #{imageqnet_forward.2} parent=27 // pred_check
        %p356 = pneg %p123
      $region38: #{imageqnet_forward.2} parent=27 // pred_check_branch
        %358 = sbr.rel (%p356) target = $region40
      $region39: #{imageqnet_forward.2} parent=27 // pred_region
        _
      $region40: #{imageqnet_forward.2} parent=27 // pred_fallthru
        _
      // Predicated region
      $region41: #{imageqnet_forward.2} parent=27 // pred_check
        %p359 = pneg %p149
      $region42: #{imageqnet_forward.2} parent=27 // pred_check_branch
        %361 = sbr.rel (%p359) target = $region44
      $region43: #{imageqnet_forward.2} parent=27 // pred_region
        _
      $region44: #{imageqnet_forward.2} parent=27 // pred_fallthru
        _
    $region28: #{imageqnet_forward.2} parent=5 // pred_fallthru
      _
    %p362 = scmp.le.s32.totalorder 2, %s11
    // Predicated region
    $region45: #{imageqnet_forward.2} parent=5 // pred_check
      %p363 = pneg %p362
    $region46: #{imageqnet_forward.2} parent=5 // pred_check_branch
      %365 = sbr.rel (%p363) target = $region48
    $region47: #{imageqnet_forward.2} parent=5 // pred_region
      %s366 = ssub.s32 %s11, 2
      // Predicated region
      $region49: #{imageqnet_forward.2} parent=47 // pred_check
        %p367 = pneg %p103
      $region50: #{imageqnet_forward.2} parent=47 // pred_check_branch
        %369 = sbr.rel (%p367) target = $region52
      $region51: #{imageqnet_forward.2} parent=47 // pred_region
        %s370 = smul.u32 2, %s23
        %p371 = scmp.lt.s32.totalorder %s22, 1
        %s372 = scalar_select %p371, %s22, 1
        %p373 = scmp.lt.s32.totalorder %s370, 1
        %s374 = scalar_select %p373, %s370, 1
        %s375 = smul.addr %s372, 2
        %s376 = sadd.s32 %s374, %s375
        %s377 = smul.addr %s376, 8
        %s378 = scalar_lea.vmem %s2, %s377
      $region52: #{imageqnet_forward.2} parent=47 // pred_fallthru
        _
      // Predicated region
      $region53: #{imageqnet_forward.2} parent=47 // pred_check
        %p379 = pneg %p129
      $region54: #{imageqnet_forward.2} parent=47 // pred_check_branch
        %381 = sbr.rel (%p379) target = $region56
      $region55: #{imageqnet_forward.2} parent=47 // pred_region
        %p382 = scmp.lt.s32.totalorder %s22, 1
        %s383 = scalar_select %p382, %s22, 1
        %s384 = smul.addr %s383, 8
        %s385 = scalar_lea.vmem %s3, %s384
      $region56: #{imageqnet_forward.2} parent=47 // pred_fallthru
        _
      // Predicated region
      $region57: #{imageqnet_forward.2} parent=47 // pred_check
        %p386 = pneg %p155
      $region58: #{imageqnet_forward.2} parent=47 // pred_check_branch
        %388 = sbr.rel (%p386) target = $region60
      $region59: #{imageqnet_forward.2} parent=47 // pred_region
        %p389 = scmp.lt.s32.totalorder %s22, 1
        %s390 = scalar_select %p389, %s22, 1
        %s391 = smul.addr %s390, 8
        %s392 = scalar_lea.vmem %s4, %s391
      $region60: #{imageqnet_forward.2} parent=47 // pred_fallthru
        _
    $region48: #{imageqnet_forward.2} parent=5 // pred_fallthru
      _
  $region6: #{imageqnet_forward.2} parent=0 // loop_footer
    %s15 = sadd.s32 1, %s11
  $region7: #{imageqnet_forward.2} parent=0 // loop_footer_branch
    %10 = sbr.rel target = $region3
  $region8: #{imageqnet_forward.2} parent=0 // loop_exit
    _

// kernel: imageqnet_forward.3
$region0: #{imageqnet_forward.3}
  #allocation0 [shape = 'u32[]', space=smem, size = 0x4, offset = 0x4, fixed_abs, tag = 'smem constant byte address 0x4 - core index']
  #allocation1 [shape = 'u32[72,128]{1,0:T(1,128)}', space=vmem, size = 0x9000, scoped, tag = 'internal scratch']
  %s0 = inlined_call_operand.vmem [shape: f32[2,8,256], index: 0, kind: input, shape index: {}]
  %s1 = inlined_call_operand.vmem [shape: f32[8,1], index: 1, kind: input, shape index: {}]
  %s2 = inlined_call_operand.vmem [shape: f32[8,1], index: 2, kind: input, shape index: {}]
  %s3 = inlined_call_operand.vmem [shape: f32[2,256,8], index: 3, kind: output, shape index: {}]
  %s4 = sld [smem:[#allocation0]]
  $region45: #{imageqnet_forward.3} parent=0
    _
  %s6 = ssub.s32 1, %s4
  %s7 = scalar_select 0, %s6, %s4
  loop: start=0, step=1, limit=4
  $region2: #{imageqnet_forward.3} parent=0 // loop_pre_header
    _
  $region3: #{imageqnet_forward.3} parent=0 // loop_header
    %s9 = sphi 0, %s13
    %p10 = scmp.ge.s32.totalorder %s9, 4
    %s16 = sphi 0, %s28
    %s17 = sphi 0, %s24
    %s18 = sphi 0, %s16
    %s19 = sphi 0, %s17
    %s20 = sphi 0, %s18
    %s21 = sphi 0, %s19
    %s33 = sphi 0, %s35
    %s36 = sphi 0, %s33
    %s37 = sphi 0, %s36
    %s53 = sphi 0, %s37
    %s57 = sphi 0, %s57
    %s59 = sphi 0, %s57
    %s60 = sphi 0, %s59
    %s74 = sphi 0, %s60
    %s78 = sphi 0, %s78
    %s80 = sphi 0, %s78
    %s81 = sphi 0, %s80
    %s95 = sphi 0, %s81
    %s103 = sphi 0, %s105
    %s106 = sphi 0, %s103
    %s107 = sphi 0, %s106
    %s123 = sphi 0, %s107
  $region4: #{imageqnet_forward.3} parent=0 // loop_header_branch
    %12 = sbr.rel (%p10) target = $region8
  $region5: #{imageqnet_forward.3} parent=0 // loop_body
    %s14 = ssub.s32 %s9, 1
    %s15 = ssub.s32 %s9, 2
    %s22 = sadd.s32 1, %s17
    %p23 = scmp.ge.s32.totalorder %s22, 1
    %s24 = scalar_select %p23, 0, %s22
    %s25 = sadd.s32 1, %s16
    %s26 = scalar_select %p23, %s25, %s16
    %p27 = scmp.ge.s32.totalorder %s26, 2
    %s28 = scalar_select %p27, 0, %s26
    %s29 = ssub.s32 %s16, %s28
    %s30 = ssub.s32 %s17, %s24
    %s31 = sor.u32 %s29, %s30
    %p32 = scmp.eq.s32.totalorder %s31, 0
    %s34 = sadd.s32 %s33, 1
    %s35 = scalar_select %p32, %s33, %s34
    %p38 = pneg %p32
    %p39 = scmp.eq.s32.totalorder %s9, 1
    %p40 = por %p38, %p39
    %p41 = scmp.ne.s32.totalorder %s33, %s36
    %p42 = scmp.eq.s32.totalorder %s9, 0
    %p43 = por %p41, %p42
    %p44 = scmp.ne.s32.totalorder %s33, %s36
    %p45 = scmp.eq.s32.totalorder %s14, 1
    %p46 = por %p44, %p45
    %p47 = scmp.ne.s32.totalorder %s36, %s37
    %p48 = scmp.eq.s32.totalorder %s14, 0
    %p49 = por %p47, %p48
    %p50 = scmp.ne.s32.totalorder %s36, %s37
    %p51 = scmp.eq.s32.totalorder %s15, 1
    %p52 = por %p50, %p51
    %p54 = scmp.ne.s32.totalorder %s37, %s53
    %p55 = scmp.eq.s32.totalorder %s15, 0
    %p56 = por %p54, %p55
    %s58 = sadd.s32 %s57, 1
    %p61 = scmp.eq.s32.totalorder %s9, 1
    %p62 = scmp.ne.s32.totalorder %s57, %s59
    %p63 = scmp.eq.s32.totalorder %s9, 0
    %p64 = por %p62, %p63
    %p65 = scmp.ne.s32.totalorder %s57, %s59
    %p66 = scmp.eq.s32.totalorder %s14, 1
    %p67 = por %p65, %p66
    %p68 = scmp.ne.s32.totalorder %s59, %s60
    %p69 = scmp.eq.s32.totalorder %s14, 0
    %p70 = por %p68, %p69
    %p71 = scmp.ne.s32.totalorder %s59, %s60
    %p72 = scmp.eq.s32.totalorder %s15, 1
    %p73 = por %p71, %p72
    %p75 = scmp.ne.s32.totalorder %s60, %s74
    %p76 = scmp.eq.s32.totalorder %s15, 0
    %p77 = por %p75, %p76
    %s79 = sadd.s32 %s78, 1
    %p82 = scmp.eq.s32.totalorder %s9, 1
    %p83 = scmp.ne.s32.totalorder %s78, %s80
    %p84 = scmp.eq.s32.totalorder %s9, 0
    %p85 = por %p83, %p84
    %p86 = scmp.ne.s32.totalorder %s78, %s80
    %p87 = scmp.eq.s32.totalorder %s14, 1
    %p88 = por %p86, %p87
    %p89 = scmp.ne.s32.totalorder %s80, %s81
    %p90 = scmp.eq.s32.totalorder %s14, 0
    %p91 = por %p89, %p90
    %p92 = scmp.ne.s32.totalorder %s80, %s81
    %p93 = scmp.eq.s32.totalorder %s15, 1
    %p94 = por %p92, %p93
    %p96 = scmp.ne.s32.totalorder %s81, %s95
    %p97 = scmp.eq.s32.totalorder %s15, 0
    %p98 = por %p96, %p97
    %s99 = ssub.s32 %s16, %s28
    %s100 = ssub.s32 %s17, %s24
    %s101 = sor.u32 %s99, %s100
    %p102 = scmp.eq.s32.totalorder %s101, 0
    %s104 = sadd.s32 %s103, 1
    %s105 = scalar_select %p102, %s103, %s104
    %p108 = pneg %p102
    %p109 = scmp.eq.s32.totalorder %s9, 1
    %p110 = por %p108, %p109
    %p111 = scmp.ne.s32.totalorder %s103, %s106
    %p112 = scmp.eq.s32.totalorder %s9, 0
    %p113 = por %p111, %p112
    %p114 = scmp.ne.s32.totalorder %s103, %s106
    %p115 = scmp.eq.s32.totalorder %s14, 1
    %p116 = por %p114, %p115
    %p117 = scmp.ne.s32.totalorder %s106, %s107
    %p118 = scmp.eq.s32.totalorder %s14, 0
    %p119 = por %p117, %p118
    %p120 = scmp.ne.s32.totalorder %s106, %s107
    %p121 = scmp.eq.s32.totalorder %s15, 1
    %p122 = por %p120, %p121
    %p124 = scmp.ne.s32.totalorder %s107, %s123
    %p125 = scmp.eq.s32.totalorder %s15, 0
    %p126 = por %p124, %p125
    %p127 = scmp.le.s32.totalorder 1, %s9
    %p128 = scmp.lt.s32.totalorder %s9, 3
    %p129 = pnand %p127, %p128
    %p130 = pneg %p129
    // Predicated region
    $region9: #{imageqnet_forward.3} parent=5 // pred_check
      _
    $region10: #{imageqnet_forward.3} parent=5 // pred_check_branch
      %132 = sbr.rel (%p129) target = $region12
    $region11: #{imageqnet_forward.3} parent=5 // pred_region
      %s133 = ssub.s32 %s9, 1
      // Predicated region
      $region13: #{imageqnet_forward.3} parent=11 // pred_check
        %p134 = pneg %p70
      $region14: #{imageqnet_forward.3} parent=11 // pred_check_branch
        %136 = sbr.rel (%p134) target = $region16
      $region15: #{imageqnet_forward.3} parent=11 // pred_region
        _
      $region16: #{imageqnet_forward.3} parent=11 // pred_fallthru
        _
      // Predicated region
      $region17: #{imageqnet_forward.3} parent=11 // pred_check
        %p137 = pneg %p91
      $region18: #{imageqnet_forward.3} parent=11 // pred_check_branch
        %139 = sbr.rel (%p137) target = $region20
      $region19: #{imageqnet_forward.3} parent=11 // pred_region
        _
      $region20: #{imageqnet_forward.3} parent=11 // pred_fallthru
        _
    $region12: #{imageqnet_forward.3} parent=5 // pred_fallthru
      _
    %p140 = scmp.lt.s32.totalorder %s9, 2
    // Predicated region
    $region21: #{imageqnet_forward.3} parent=5 // pred_check
      %p141 = pneg %p140
    $region22: #{imageqnet_forward.3} parent=5 // pred_check_branch
      %143 = sbr.rel (%p141) target = $region24
    $region23: #{imageqnet_forward.3} parent=5 // pred_region
      // Predicated region
      $region25: #{imageqnet_forward.3} parent=23 // pred_check
        %p144 = pneg %p43
      $region26: #{imageqnet_forward.3} parent=23 // pred_check_branch
        %146 = sbr.rel (%p144) target = $region28
      $region27: #{imageqnet_forward.3} parent=23 // pred_region
        %s147 = smul.u32 2, %s17
        %p148 = scmp.lt.s32.totalorder %s16, 1
        %s149 = scalar_select %p148, %s16, 1
        %p150 = scmp.lt.s32.totalorder %s147, 1
        %s151 = scalar_select %p150, %s147, 1
        %s152 = smul.addr %s149, 2
        %s153 = sadd.s32 %s151, %s152
        %s154 = smul.addr %s153, 8
        %s155 = scalar_lea.vmem %s0, %s154
        %s156 = smul.u32 2, %s17
      $region28: #{imageqnet_forward.3} parent=23 // pred_fallthru
        _
    $region24: #{imageqnet_forward.3} parent=5 // pred_fallthru
      _
    %p157 = scmp.le.s32.totalorder 1, %s9
    %p158 = scmp.lt.s32.totalorder %s9, 3
    %p159 = pnand %p157, %p158
    %p160 = pneg %p159
    // Predicated region
    $region29: #{imageqnet_forward.3} parent=5 // pred_check
      _
    $region30: #{imageqnet_forward.3} parent=5 // pred_check_branch
      %162 = sbr.rel (%p159) target = $region32
    $region31: #{imageqnet_forward.3} parent=5 // pred_region
      %s163 = ssub.s32 %s9, 1
      %s164 = smul.u32 2, %s19
      %p165 = scmp.lt.s32.totalorder %s18, 1
      %s166 = scalar_select %p165, %s18, 1
      %p167 = scmp.lt.s32.totalorder %s164, 1
      %s168 = scalar_select %p167, %s164, 1
      %s169 = smul.addr %s166, 2
      %s170 = sadd.s32 %s168, %s169
      %s171 = smul.addr %s170, 8
      %s172 = scalar_lea.vmem %s0, %s171
      %p173 = pneg %p49
      %p174 = pneg %p46
      %p175 = pneg %p70
      %p176 = pneg %p67
      %p177 = pneg %p91
      %p178 = pneg %p88
      %p179 = pneg %p119
      %p180 = pneg %p116
      %s181 = smul.u32 32, %s19
      %p182 = scmp.lt.s32.totalorder %s18, 1
      %s183 = scalar_select %p182, %s18, 1
      %p184 = scmp.lt.s32.totalorder %s181, 31
      %s185 = scalar_select %p184, %s181, 31
      %s186 = smul.addr %s183, 32
      %s187 = sadd.s32 %s185, %s186
      %s188 = smul.addr %s187, 8
      %s189 = scalar_lea.vmem %s3, %s188
      %s190 = smul.u32 2, %s19
      %p191 = scmp.lt.s32.totalorder %s18, 1
      %s192 = scalar_select %p191, %s18, 1
      %p193 = scmp.lt.s32.totalorder %s190, 1
      %s194 = scalar_select %p193, %s190, 1
      %s195 = smul.addr %s192, 2
      %s196 = sadd.s32 %s194, %s195
      %s197 = smul.addr %s196, 8
      %s198 = scalar_lea.vmem %s0, %s197
      %s199 = smul.u32 2, %s19
      %s200 = smul.u32 32, %s19
      %p201 = scmp.lt.s32.totalorder %s18, 1
      %s202 = scalar_select %p201, %s18, 1
      %p203 = scmp.lt.s32.totalorder %s200, 31
      %s204 = scalar_select %p203, %s200, 31
      %s205 = smul.addr %s202, 32
      %s206 = sadd.s32 %s204, %s205
      %s207 = smul.addr %s206, 8
      %s208 = scalar_lea.vmem %s3, %s207
      %s209 = smul.u32 32, %s19
      %v210 = vld [vmem:[%s198] sm:$0xff]
      %v211 = vld [vmem:[%s198 + $0x8] sm:$0xff]
      %v212 = vld [vmem:[%s1] sm:$0xff]
      %214 = vset.pattern.permute.xlu0 0
      %215 = vperm.xlu0 %214, %v212
      %v216 = vpop.permute.xlu0 %215
      %v218 = vmul.f32 %v210, %v216
      %v219 = vmul.f32 %v211, %v216
      %v220 = vld [vmem:[%s2] sm:$0xff]
      %222 = vset.pattern.permute.xlu0 0
      %223 = vperm.xlu0 %222, %v220
      %v224 = vpop.permute.xlu0 %223
      %v226 = vadd.f32 %v218, %v224
      %v227 = vadd.f32 %v219, %v224
      %228 = vxpose.xlu0.b32.start [1/16] %v226, 128
      %229 = vxpose.xlu0.b32.cont [2/16] 0.0, 128
      %230 = vxpose.xlu0.b32.cont [3/16] 0.0, 128
      %231 = vxpose.xlu0.b32.cont [4/16] 0.0, 128
      %232 = vxpose.xlu0.b32.cont [5/16] 0.0, 128
      %233 = vxpose.xlu0.b32.cont [6/16] 0.0, 128
      %234 = vxpose.xlu0.b32.cont [7/16] 0.0, 128
      %235 = vxpose.xlu0.b32.cont [8/16] 0.0, 128
      %236 = vxpose.xlu0.b32.cont [9/16] 0.0, 128
      %237 = vxpose.xlu0.b32.cont [10/16] 0.0, 128
      %238 = vxpose.xlu0.b32.cont [11/16] 0.0, 128
      %239 = vxpose.xlu0.b32.cont [12/16] 0.0, 128
      %240 = vxpose.xlu0.b32.cont [13/16] 0.0, 128
      %241 = vxpose.xlu0.b32.cont [14/16] 0.0, 128
      %242 = vxpose.xlu0.b32.cont [15/16] 0.0, 128
      %243 = vxpose.xlu0.b32.end [16/16] 0.0, 128
      %v244 = vpop.trf.xlu0
      %v245 = vpop.trf.xlu0
      %v246 = vpop.trf.xlu0
      %v247 = vpop.trf.xlu0
      %v248 = vpop.trf.xlu0
      %v249 = vpop.trf.xlu0
      %v250 = vpop.trf.xlu0
      %v251 = vpop.trf.xlu0
      %v252 = vpop.trf.xlu0
      %v253 = vpop.trf.xlu0
      %v254 = vpop.trf.xlu0
      %v255 = vpop.trf.xlu0
      %v256 = vpop.trf.xlu0
      %v257 = vpop.trf.xlu0
      %v258 = vpop.trf.xlu0
      %v259 = vpop.trf.xlu0
      %260 = vxpose.xlu0.b32.start [1/16] %v227, 128
      %261 = vxpose.xlu0.b32.cont [2/16] 0.0, 128
      %262 = vxpose.xlu0.b32.cont [3/16] 0.0, 128
      %263 = vxpose.xlu0.b32.cont [4/16] 0.0, 128
      %264 = vxpose.xlu0.b32.cont [5/16] 0.0, 128
      %265 = vxpose.xlu0.b32.cont [6/16] 0.0, 128
      %266 = vxpose.xlu0.b32.cont [7/16] 0.0, 128
      %267 = vxpose.xlu0.b32.cont [8/16] 0.0, 128
      %268 = vxpose.xlu0.b32.cont [9/16] 0.0, 128
      %269 = vxpose.xlu0.b32.cont [10/16] 0.0, 128
      %270 = vxpose.xlu0.b32.cont [11/16] 0.0, 128
      %271 = vxpose.xlu0.b32.cont [12/16] 0.0, 128
      %272 = vxpose.xlu0.b32.cont [13/16] 0.0, 128
      %273 = vxpose.xlu0.b32.cont [14/16] 0.0, 128
      %274 = vxpose.xlu0.b32.cont [15/16] 0.0, 128
      %275 = vxpose.xlu0.b32.end [16/16] 0.0, 128
      %v276 = vpop.trf.xlu0
      %v277 = vpop.trf.xlu0
      %v278 = vpop.trf.xlu0
      %v279 = vpop.trf.xlu0
      %v280 = vpop.trf.xlu0
      %v281 = vpop.trf.xlu0
      %v282 = vpop.trf.xlu0
      %v283 = vpop.trf.xlu0
      %v284 = vpop.trf.xlu0
      %v285 = vpop.trf.xlu0
      %v286 = vpop.trf.xlu0
      %v287 = vpop.trf.xlu0
      %v288 = vpop.trf.xlu0
      %v289 = vpop.trf.xlu0
      %v290 = vpop.trf.xlu0
      %v291 = vpop.trf.xlu0
      %vm292 = vcmask 64512
      %293 = vst.msk [vmem:[%s208] sm:$0xff] %vm292, %v244
      %294 = vst.msk [vmem:[%s208 + $0x8] sm:$0xff] %vm292, %v245
      %295 = vst.msk [vmem:[%s208 + $0x10] sm:$0xff] %vm292, %v246
      %296 = vst.msk [vmem:[%s208 + $0x18] sm:$0xff] %vm292, %v247
      %297 = vst.msk [vmem:[%s208 + $0x20] sm:$0xff] %vm292, %v248
      %298 = vst.msk [vmem:[%s208 + $0x28] sm:$0xff] %vm292, %v249
      %299 = vst.msk [vmem:[%s208 + $0x30] sm:$0xff] %vm292, %v250
      %300 = vst.msk [vmem:[%s208 + $0x38] sm:$0xff] %vm292, %v251
      %301 = vst.msk [vmem:[%s208 + $0x40] sm:$0xff] %vm292, %v252
      %302 = vst.msk [vmem:[%s208 + $0x48] sm:$0xff] %vm292, %v253
      %303 = vst.msk [vmem:[%s208 + $0x50] sm:$0xff] %vm292, %v254
      %304 = vst.msk [vmem:[%s208 + $0x58] sm:$0xff] %vm292, %v255
      %305 = vst.msk [vmem:[%s208 + $0x60] sm:$0xff] %vm292, %v256
      %306 = vst.msk [vmem:[%s208 + $0x68] sm:$0xff] %vm292, %v257
      %307 = vst.msk [vmem:[%s208 + $0x70] sm:$0xff] %vm292, %v258
      %308 = vst.msk [vmem:[%s208 + $0x78] sm:$0xff] %vm292, %v259
      %309 = vst.msk [vmem:[%s208 + $0x80] sm:$0xff] %vm292, %v276
      %310 = vst.msk [vmem:[%s208 + $0x88] sm:$0xff] %vm292, %v277
      %311 = vst.msk [vmem:[%s208 + $0x90] sm:$0xff] %vm292, %v278
      %312 = vst.msk [vmem:[%s208 + $0x98] sm:$0xff] %vm292, %v279
      %313 = vst.msk [vmem:[%s208 + $0xa0] sm:$0xff] %vm292, %v280
      %314 = vst.msk [vmem:[%s208 + $0xa8] sm:$0xff] %vm292, %v281
      %315 = vst.msk [vmem:[%s208 + $0xb0] sm:$0xff] %vm292, %v282
      %316 = vst.msk [vmem:[%s208 + $0xb8] sm:$0xff] %vm292, %v283
      %317 = vst.msk [vmem:[%s208 + $0xc0] sm:$0xff] %vm292, %v284
      %318 = vst.msk [vmem:[%s208 + $0xc8] sm:$0xff] %vm292, %v285
      %319 = vst.msk [vmem:[%s208 + $0xd0] sm:$0xff] %vm292, %v286
      %320 = vst.msk [vmem:[%s208 + $0xd8] sm:$0xff] %vm292, %v287
      %321 = vst.msk [vmem:[%s208 + $0xe0] sm:$0xff] %vm292, %v288
      %322 = vst.msk [vmem:[%s208 + $0xe8] sm:$0xff] %vm292, %v289
      %323 = vst.msk [vmem:[%s208 + $0xf0] sm:$0xff] %vm292, %v290
      %324 = vst.msk [vmem:[%s208 + $0xf8] sm:$0xff] %vm292, %v291
      %s325 = smul.u32 32, %s19
      %p326 = scmp.lt.s32.totalorder %s18, 1
      %s327 = scalar_select %p326, %s18, 1
      %p328 = scmp.lt.s32.totalorder %s325, 31
      %s329 = scalar_select %p328, %s325, 31
      %s330 = smul.addr %s327, 32
      %s331 = sadd.s32 %s329, %s330
      %s332 = smul.addr %s331, 8
      %s333 = scalar_lea.vmem %s3, %s332
      // Predicated region
      $region33: #{imageqnet_forward.3} parent=31 // pred_check
        %p334 = pneg %p116
      $region34: #{imageqnet_forward.3} parent=31 // pred_check_branch
        %336 = sbr.rel (%p334) target = $region36
      $region35: #{imageqnet_forward.3} parent=31 // pred_region
        %s337 = smul.u32 32, %s19
      $region36: #{imageqnet_forward.3} parent=31 // pred_fallthru
        _
    $region32: #{imageqnet_forward.3} parent=5 // pred_fallthru
      _
    %p338 = scmp.le.s32.totalorder 2, %s9
    // Predicated region
    $region37: #{imageqnet_forward.3} parent=5 // pred_check
      %p339 = pneg %p338
    $region38: #{imageqnet_forward.3} parent=5 // pred_check_branch
      %341 = sbr.rel (%p339) target = $region40
    $region39: #{imageqnet_forward.3} parent=5 // pred_region
      %s342 = ssub.s32 %s9, 2
      // Predicated region
      $region41: #{imageqnet_forward.3} parent=39 // pred_check
        %p343 = pneg %p122
      $region42: #{imageqnet_forward.3} parent=39 // pred_check_branch
        %345 = sbr.rel (%p343) target = $region44
      $region43: #{imageqnet_forward.3} parent=39 // pred_region
        %s346 = smul.u32 32, %s21
        %p347 = scmp.lt.s32.totalorder %s20, 1
        %s348 = scalar_select %p347, %s20, 1
        %p349 = scmp.lt.s32.totalorder %s346, 31
        %s350 = scalar_select %p349, %s346, 31
        %s351 = smul.addr %s348, 32
        %s352 = sadd.s32 %s350, %s351
        %s353 = smul.addr %s352, 8
        %s354 = scalar_lea.vmem %s3, %s353
      $region44: #{imageqnet_forward.3} parent=39 // pred_fallthru
        _
    $region40: #{imageqnet_forward.3} parent=5 // pred_fallthru
      _
  $region6: #{imageqnet_forward.3} parent=0 // loop_footer
    %s13 = sadd.s32 1, %s9
  $region7: #{imageqnet_forward.3} parent=0 // loop_footer_branch
    %8 = sbr.rel target = $region3
  $region8: #{imageqnet_forward.3} parent=0 // loop_exit
    _

</llo_original>
